<compile_context>
chip_gen: v7x
topology: tpu7x:2x2x1
jax: 0.10.0
libtpu: 0.0.40
codegen_flags: <defaults>
</compile_context>

<pallas_src>
import functools

import jax
import jax.numpy as jnp
from jax import lax
from jax.experimental import pallas as pl
from jax.experimental.pallas import tpu as pltpu

K = 5  # conv kernel size, fixed inside the PyTorch module


# --------------------------------------------------------------------------
# Pallas kernel: one grid step = one batch item x one L-tile (with halo).
# --------------------------------------------------------------------------
def _basic_block_kernel(
    xw_ref, sa_ref, ba_ref, w1_ref, b1_ref, w2_ref, *rest,
    dilation, tile_l, halo, l_true, use_shortcut_conv,
):
    if use_shortcut_conv:
        wsc_ref, out_ref = rest
    else:
        (out_ref,) = rest

    c_in = xw_ref.shape[2]
    tile_in = xw_ref.shape[3]
    c_out = out_ref.shape[1]
    c_mid = w1_ref.shape[0] // 2

    j = pl.program_id(1)                                    # L-tile index

    x_w = xw_ref[0, 0]                                      # (C_in, TILE_IN) bf16
    x_f = x_w.astype(jnp.float32)

    # Fused BN-a + ReLU for both branches (f32 elementwise on the VPU).
    x2 = jnp.concatenate([x_f, x_f], axis=0)                # (2*C_in, TILE_IN)
    h = jnp.maximum(x2 * sa_ref[...] + ba_ref[...], 0.0)

    # Both 1x1 convs (with the following BN folded in) as ONE block-diagonal matmul.
    z = jnp.dot(w1_ref[...], h.astype(jnp.bfloat16),
                preferred_element_type=jnp.float32)          # (2*C_mid, TILE_IN)
    z = jnp.maximum(z + b1_ref[...], 0.0)                    # ReLU (dropout = identity)

    # Zero columns outside the true signal: reproduces the zero padding the k=5 convs
    # apply to their input in the PyTorch module (and the L-remainder pad, if any).
    col = lax.broadcasted_iota(jnp.int32, (1, tile_in), 1)
    pos = col + (j * tile_l - halo)                          # global signal position
    z = jnp.where(jnp.logical_and(pos >= 0, pos < l_true), z, 0.0)

    # k=5 dilated convs of both branches: per tap, one block-diagonal (C_out, 2*C_mid)
    # matmul over a halo-covered static lane slice; accumulate the K taps in f32.
    w2 = w2_ref[...]                                         # (K, C_out, 2*C_mid) bf16
    acc = jnp.zeros((c_out, tile_l), jnp.float32)
    for k in range(K):                                       # static unroll, K = 5
        a0 = halo + (k - K // 2) * 1                         # branch0 tap offset
        a1 = halo + (k - K // 2) * dilation                  # branch1 tap offset
        rhs = jnp.concatenate(
            [z[:c_mid, a0:a0 + tile_l], z[c_mid:, a1:a1 + tile_l]],
            axis=0).astype(jnp.bfloat16)                     # (2*C_mid, TILE_L)
        acc = acc + jnp.dot(w2[k], rhs, preferred_element_type=jnp.float32)

    # Shortcut / residual on the tile's center columns.
    x_c = x_w[:, halo:halo + tile_l]                         # (C_in, TILE_L) bf16
    if use_shortcut_conv:
        r = jnp.dot(wsc_ref[...], x_c, preferred_element_type=jnp.float32)
    else:
        r = x_c.astype(jnp.float32)                          # identity (C_in == C_out)

    out_ref[0] = (acc + r).astype(out_ref.dtype)             # single lane-dense store


# --------------------------------------------------------------------------
# Wrapper: parameter folding + windowing + pallas_call plumbing.
# --------------------------------------------------------------------------
def _fold_bn(gamma, beta, mean, var, eps=1e-5):
    scale = gamma / jnp.sqrt(var + eps)
    shift = beta - mean * scale
    return scale.astype(jnp.float32), shift.astype(jnp.float32)


def basic_block_forward(x_ncl, params, *, stride, dilation, tile_l=512,
                        out_dtype=jnp.float32):
    assert stride == 1, "stride > 1 not implemented"  # TODO(synk)
    N, C_in, L = x_ncl.shape
    C_half, C_mid, _ = params["w0_2"].shape            # PyTorch (C_half, C_mid, K)
    C_out = 2 * C_half
    use_shortcut_conv = not (C_in == C_out and stride == 1)

    assert tile_l % 128 == 0, "tile_l must be lane-aligned (multiple of 128)"
    tile_l = min(tile_l, pl.cdiv(L, 128) * 128)        # don't over-tile small inputs
    n_tiles = pl.cdiv(L, tile_l)
    halo = (K // 2) * max(dilation, 1)                 # covers both branches' taps
    tile_in = tile_l + 2 * halo
    l_core = n_tiles * tile_l

    # bf16 activations across the HBM boundary (the block is HBM-bound); pad + window.
    x_b = x_ncl.astype(jnp.bfloat16)
    x_pad = jnp.zeros((N, C_in, l_core + 2 * halo), jnp.bfloat16)
    x_pad = x_pad.at[:, :, halo:halo + L].set(x_b)
    windows = jnp.stack(
        [x_pad[:, :, j * tile_l: j * tile_l + tile_in] for j in range(n_tiles)],
        axis=1)                                        # (N, n_tiles, C_in, TILE_IN)

    # BN before the 1x1 conv: per-channel scale/shift, both branches stacked.
    s0a, b0a = _fold_bn(*params["bn0a"])
    s1a, b1a = _fold_bn(*params["bn1a"])
    sa = jnp.concatenate([s0a, s1a])[:, None]                          # (2*C_in, 1)
    ba = jnp.concatenate([b0a, b1a])[:, None]

    # BN after the 1x1 conv: folded into block-diagonal conv weight + bias.
    s0b, b0b = _fold_bn(*params["bn0b"])
    s1b, b1b = _fold_bn(*params["bn1b"])
    w01 = params["w0_1"][:, :, 0] * s0b[:, None]
    w11 = params["w1_1"][:, :, 0] * s1b[:, None]
    w1 = jnp.zeros((2 * C_mid, 2 * C_in), jnp.float32)
    w1 = (w1.at[:C_mid, :C_in].set(w01)
            .at[C_mid:, C_in:].set(w11)).astype(jnp.bfloat16)          # (2*C_mid, 2*C_in)
    b1 = jnp.concatenate([b0b, b1b])[:, None]                          # (2*C_mid, 1)

    # Per-tap block-diagonal k=5 conv weights (branches fused in output channel order).
    w2 = jnp.zeros((K, C_out, 2 * C_mid), jnp.float32)
    w2 = (w2.at[:, :C_half, :C_mid].set(jnp.transpose(params["w0_2"], (2, 0, 1)))
            .at[:, C_half:, C_mid:].set(jnp.transpose(params["w1_2"], (2, 0, 1)))
          ).astype(jnp.bfloat16)

    args = [windows, sa, ba, w1, b1, w2]
    sc_bytes = 0
    if use_shortcut_conv:
        wsc = params["wsc"][:, :, 0].astype(jnp.bfloat16)              # (C_out, C_in)
        args.append(wsc)
        sc_bytes = wsc.size * 2

    def _full_spec(shape):
        zeros = (0,) * len(shape)
        return pl.BlockSpec(shape, lambda n, j: zeros)   # params stay resident in VMEM

    in_specs = [pl.BlockSpec((1, 1, C_in, tile_in), lambda n, j: (n, j, 0, 0))]
    in_specs += [_full_spec(a.shape) for a in args[1:]]
    out_spec = pl.BlockSpec((1, C_out, tile_l), lambda n, j: (n, 0, j))

    flops_step = (2 * (2 * C_mid) * (2 * C_in) * tile_in
                  + 2 * K * C_out * (2 * C_mid) * tile_l)
    if use_shortcut_conv:
        flops_step += 2 * C_out * C_in * tile_l
    bytes_acc = (windows.size * 2
                 + N * C_out * l_core * jnp.dtype(out_dtype).itemsize
                 + sa.size * 4 + ba.size * 4 + w1.size * 2 + b1.size * 4
                 + w2.size * 2 + sc_bytes)
    cost = pl.CostEstimate(flops=int(N * n_tiles * flops_step),
                           transcendentals=0, bytes_accessed=int(bytes_acc))

    kernel = functools.partial(
        _basic_block_kernel,
        dilation=dilation, tile_l=tile_l, halo=halo, l_true=L,
        use_shortcut_conv=use_shortcut_conv,
    )

    out = pl.pallas_call(
        kernel,
        out_shape=jax.ShapeDtypeStruct((N, C_out, l_core), out_dtype),
        grid=(N, n_tiles),
        in_specs=in_specs,
        out_specs=out_spec,
        compiler_params=pltpu.CompilerParams(
            dimension_semantics=("parallel", "parallel")),
        cost_estimate=cost,
    )(*args)
    return out[:, :, :L] if l_core != L else out


# --------------------------------------------------------------------------
# Pure-JAX reference (mirrors the PyTorch module in eval mode) for checking.
# --------------------------------------------------------------------------
def _conv1d(x_ncl, w, stride=1, padding=0, dilation=1):
    return lax.conv_general_dilated(
        x_ncl, w, window_strides=(stride,), padding=[(padding, padding)],
        rhs_dilation=(dilation,), dimension_numbers=("NCH", "OIH", "NCH"))


def _bn_eval(x_ncl, gamma, beta, mean, var, eps=1e-5):
    inv = gamma / jnp.sqrt(var + eps)
    return (x_ncl - mean[None, :, None]) * inv[None, :, None] + beta[None, :, None]


def basic_block_reference(x_ncl, params, *, stride, dilation):
    def branch(bn_a, w1, bn_b, w2, dil):
        h = jnp.maximum(_bn_eval(x_ncl, *bn_a), 0.0)
        h = _conv1d(h, w1)
        h = jnp.maximum(_bn_eval(h, *bn_b), 0.0)
        pad = (K - 1) * dil // 2
        return _conv1d(h, w2, stride=stride, padding=pad, dilation=dil)

    x0 = branch(params["bn0a"], params["w0_1"], params["bn0b"], params["w0_2"], 1)
    x1 = branch(params["bn1a"], params["w1_1"], params["bn1b"], params["w1_2"], dilation)
    out = jnp.concatenate([x0, x1], axis=1)
    C_in, C_out = x_ncl.shape[1], out.shape[1]
    if C_in == C_out and stride == 1:
        r = x_ncl
    else:
        r = _conv1d(x_ncl, params["wsc"], stride=stride)
    return out + r


# --------------------------------------------------------------------------
# Deterministic parameter construction + demo.
# --------------------------------------------------------------------------
def make_params(key, C_in, C_out):
    C_mid, C_half = C_in // 2, C_out // 2
    keys = jax.random.split(key, 16)

    def bn(k, C):
        k1, k2, k3, k4 = jax.random.split(k, 4)
        gamma = jax.random.uniform(k1, (C,), jnp.float32, 0.5, 1.5)
        beta = jax.random.normal(k2, (C,), jnp.float32) * 0.1
        mean = jax.random.normal(k3, (C,), jnp.float32) * 0.1
        var = jax.random.uniform(k4, (C,), jnp.float32, 0.5, 1.5)
        return (gamma, beta, mean, var)

    return {
        "bn0a": bn(keys[0], C_in),
        "w0_1": jax.random.normal(keys[1], (C_mid, C_in, 1), jnp.float32) * 0.2,
        "bn0b": bn(keys[2], C_mid),
        "w0_2": jax.random.normal(keys[3], (C_half, C_mid, K), jnp.float32) * 0.2,
        "bn1a": bn(keys[4], C_in),
        "w1_1": jax.random.normal(keys[5], (C_mid, C_in, 1), jnp.float32) * 0.2,
        "bn1b": bn(keys[6], C_mid),
        "w1_2": jax.random.normal(keys[7], (C_half, C_mid, K), jnp.float32) * 0.2,
        "wsc":  jax.random.normal(keys[8], (C_out, C_in, 1), jnp.float32) * 0.2,
    }


if __name__ == "__main__":
    # Module config: in_channels=8, out_channels=16, stride=1, dropout=0.1, dilation=2.
    # L = 256 with tile_l = 128 exercises the (N, L-tile) grid (2 x 2 = 4 steps).
    N, C_in, C_out, L = 2, 8, 16, 256
    stride, dilation = 1, 2

    key = jax.random.PRNGKey(0)
    k_x, k_p = jax.random.split(key)
    x = jax.random.normal(k_x, (N, C_in, L), jnp.float32)  # PyTorch NCL layout
    params = make_params(k_p, C_in, C_out)

    fwd = jax.jit(functools.partial(basic_block_forward, stride=stride,
                                    dilation=dilation, tile_l=128))
    out = jax.block_until_ready(fwd(x, params))

    ref = basic_block_reference(x, params, stride=stride, dilation=dilation)
    assert out.shape == (N, C_out, L), out.shape
    # Tolerance reflects bf16 activations / MXU inputs (f32 accumulation) vs f32 ref.
    max_err = float(jnp.max(jnp.abs(out - ref)))
    assert jnp.allclose(out, ref, atol=5e-2, rtol=5e-2), max_err

    print("KERNEL_OK")
</pallas_src>

<mosaic_0001>
module attributes {stable_mosaic.version = 11 : i64} {
  func.func @_basic_block_kernel(%arg0: i32, %arg1: i32, %arg2: memref<1x1x8x136xbf16, #tpu.memory_space<vmem>>, %arg3: memref<16x1xf32, #tpu.memory_space<vmem>>, %arg4: memref<16x1xf32, #tpu.memory_space<vmem>>, %arg5: memref<8x16xbf16, #tpu.memory_space<vmem>>, %arg6: memref<8x1xf32, #tpu.memory_space<vmem>>, %arg7: memref<5x16x8xbf16, #tpu.memory_space<vmem>>, %arg8: memref<16x8xbf16, #tpu.memory_space<vmem>>, %arg9: memref<1x16x128xf32, #tpu.memory_space<vmem>>) attributes {dimension_semantics = [#tpu.dimension_semantics<parallel>, #tpu.dimension_semantics<parallel>], iteration_bounds = array<i64: 2, 2>, scalar_prefetch = 0 : i64, scratch_operands = 0 : i64, tpu.core_type = #tpu.core_type<tc>, window_params = [{transform_indices = @transform_0, window_bounds = array<i64: 1, 1, 8, 136>}, {pipeline_mode = #tpu.pipeline_mode<synchronous>, transform_indices = @transform_1, window_bounds = array<i64: 16, 1>}, {pipeline_mode = #tpu.pipeline_mode<synchronous>, transform_indices = @transform_2, window_bounds = array<i64: 16, 1>}, {pipeline_mode = #tpu.pipeline_mode<synchronous>, transform_indices = @transform_3, window_bounds = array<i64: 8, 16>}, {pipeline_mode = #tpu.pipeline_mode<synchronous>, transform_indices = @transform_4, window_bounds = array<i64: 8, 1>}, {pipeline_mode = #tpu.pipeline_mode<synchronous>, transform_indices = @transform_5, window_bounds = array<i64: 5, 16, 8>}, {pipeline_mode = #tpu.pipeline_mode<synchronous>, transform_indices = @transform_6, window_bounds = array<i64: 16, 8>}, {transform_indices = @transform_7, window_bounds = array<i64: 1, 16, 128>}]} {
    %c0 = arith.constant 0 : index
    %c0_0 = arith.constant 0 : index
    %c0_1 = arith.constant 0 : index
    %c0_2 = arith.constant 0 : index
    %0 = vector.load %arg2[%c0, %c0_0, %c0_1, %c0_2] : memref<1x1x8x136xbf16, #tpu.memory_space<vmem>>, vector<1x1x8x136xbf16>
    %1 = vector.shape_cast %0 : vector<1x1x8x136xbf16> to vector<8x136xbf16>
    %2 = arith.extf %1 : vector<8x136xbf16> to vector<8x136xf32>
    %3 = tpu.concatenate %2, %2 in 0 : vector<8x136xf32>, vector<8x136xf32> -> vector<16x136xf32>
    %c0_3 = arith.constant 0 : index
    %c0_4 = arith.constant 0 : index
    %4 = vector.load %arg3[%c0_3, %c0_4] : memref<16x1xf32, #tpu.memory_space<vmem>>, vector<16x1xf32>
    %5 = vector.broadcast %4 : vector<16x1xf32> to vector<16x136xf32>
    %6 = arith.mulf %3, %5 : vector<16x136xf32>
    %c0_5 = arith.constant 0 : index
    %c0_6 = arith.constant 0 : index
    %7 = vector.load %arg4[%c0_5, %c0_6] : memref<16x1xf32, #tpu.memory_space<vmem>>, vector<16x1xf32>
    %8 = vector.broadcast %7 : vector<16x1xf32> to vector<16x136xf32>
    %9 = arith.addf %6, %8 : vector<16x136xf32>
    %cst = arith.constant 0.000000e+00 : f32
    %10 = vector.broadcast %cst : f32 to vector<16x136xf32>
    %11 = arith.maximumf %9, %10 : vector<16x136xf32>
    %c0_7 = arith.constant 0 : index
    %c0_8 = arith.constant 0 : index
    %12 = vector.load %arg5[%c0_7, %c0_8] : memref<8x16xbf16, #tpu.memory_space<vmem>>, vector<8x16xbf16>
    %13 = arith.truncf %11 : vector<16x136xf32> to vector<16x136xbf16>
    %cst_9 = arith.constant dense<0.000000e+00> : vector<8x136xf32>
    %14 = tpu.matmul %12, %13, %cst_9 {dimension_numbers = #tpu.dot_dimension_numbers<[1], [0], [0], [1], [0, 0, 1, 1], [], []>} : vector<8x16xbf16>, vector<16x136xbf16>, vector<8x136xf32> -> vector<8x136xf32>
    %c0_10 = arith.constant 0 : index
    %c0_11 = arith.constant 0 : index
    %15 = vector.load %arg6[%c0_10, %c0_11] : memref<8x1xf32, #tpu.memory_space<vmem>>, vector<8x1xf32>
    %16 = vector.broadcast %15 : vector<8x1xf32> to vector<8x136xf32>
    %17 = arith.addf %14, %16 : vector<8x136xf32>
    %cst_12 = arith.constant 0.000000e+00 : f32
    %18 = vector.broadcast %cst_12 : f32 to vector<8x136xf32>
    %19 = arith.maximumf %17, %18 : vector<8x136xf32>
    %20 = tpu.iota {dimensions = array<i32: 1>} : vector<1x136xi32>
    %c128_i32 = arith.constant 128 : i32
    %21 = arith.muli %arg1, %c128_i32 : i32
    %c4_i32 = arith.constant 4 : i32
    %22 = arith.subi %21, %c4_i32 : i32
    %23 = vector.broadcast %22 : i32 to vector<1x136xi32>
    %24 = arith.addi %20, %23 : vector<1x136xi32>
    %c0_i32 = arith.constant 0 : i32
    %25 = vector.broadcast %c0_i32 : i32 to vector<1x136xi32>
    %26 = arith.cmpi sge, %24, %25 : vector<1x136xi32>
    %c256_i32 = arith.constant 256 : i32
    %27 = vector.broadcast %c256_i32 : i32 to vector<1x136xi32>
    %28 = arith.cmpi slt, %24, %27 : vector<1x136xi32>
    %29 = arith.andi %26, %28 : vector<1x136xi1>
    %cst_13 = arith.constant 0.000000e+00 : f32
    %30 = vector.shape_cast %29 : vector<1x136xi1> to vector<1x136xi1>
    %31 = vector.broadcast %30 : vector<1x136xi1> to vector<8x136xi1>
    %32 = vector.broadcast %cst_13 : f32 to vector<8x136xf32>
    %33 = arith.select %31, %19, %32 : vector<8x136xi1>, vector<8x136xf32>
    %c0_14 = arith.constant 0 : index
    %c0_15 = arith.constant 0 : index
    %c0_16 = arith.constant 0 : index
    %34 = vector.load %arg7[%c0_14, %c0_15, %c0_16] : memref<5x16x8xbf16, #tpu.memory_space<vmem>>, vector<5x16x8xbf16>
    %cst_17 = arith.constant 0.000000e+00 : f32
    %35 = vector.broadcast %cst_17 : f32 to vector<16x128xf32>
    %36 = vector.extract_strided_slice %33 {offsets = [0, 2], sizes = [4, 128], strides = [1, 1]} : vector<8x136xf32> to vector<4x128xf32>
    %37 = vector.extract_strided_slice %33 {offsets = [4, 0], sizes = [4, 128], strides = [1, 1]} : vector<8x136xf32> to vector<4x128xf32>
    %38 = tpu.concatenate %36, %37 in 0 : vector<4x128xf32>, vector<4x128xf32> -> vector<8x128xf32>
    %39 = arith.truncf %38 : vector<8x128xf32> to vector<8x128xbf16>
    %40 = vector.extract_strided_slice %34 {offsets = [0, 0, 0], sizes = [1, 16, 8], strides = [1, 1, 1]} : vector<5x16x8xbf16> to vector<1x16x8xbf16>
    %41 = vector.shape_cast %40 : vector<1x16x8xbf16> to vector<16x8xbf16>
    %cst_18 = arith.constant dense<0.000000e+00> : vector<16x128xf32>
    %42 = tpu.matmul %41, %39, %cst_18 {dimension_numbers = #tpu.dot_dimension_numbers<[1], [0], [0], [1], [0, 0, 1, 1], [], []>} : vector<16x8xbf16>, vector<8x128xbf16>, vector<16x128xf32> -> vector<16x128xf32>
    %43 = arith.addf %35, %42 : vector<16x128xf32>
    %44 = vector.extract_strided_slice %33 {offsets = [0, 3], sizes = [4, 128], strides = [1, 1]} : vector<8x136xf32> to vector<4x128xf32>
    %45 = vector.extract_strided_slice %33 {offsets = [4, 2], sizes = [4, 128], strides = [1, 1]} : vector<8x136xf32> to vector<4x128xf32>
    %46 = tpu.concatenate %44, %45 in 0 : vector<4x128xf32>, vector<4x128xf32> -> vector<8x128xf32>
    %47 = arith.truncf %46 : vector<8x128xf32> to vector<8x128xbf16>
    %48 = vector.extract_strided_slice %34 {offsets = [1, 0, 0], sizes = [1, 16, 8], strides = [1, 1, 1]} : vector<5x16x8xbf16> to vector<1x16x8xbf16>
    %49 = vector.shape_cast %48 : vector<1x16x8xbf16> to vector<16x8xbf16>
    %cst_19 = arith.constant dense<0.000000e+00> : vector<16x128xf32>
    %50 = tpu.matmul %49, %47, %cst_19 {dimension_numbers = #tpu.dot_dimension_numbers<[1], [0], [0], [1], [0, 0, 1, 1], [], []>} : vector<16x8xbf16>, vector<8x128xbf16>, vector<16x128xf32> -> vector<16x128xf32>
    %51 = arith.addf %43, %50 : vector<16x128xf32>
    %52 = vector.extract_strided_slice %33 {offsets = [0, 4], sizes = [4, 128], strides = [1, 1]} : vector<8x136xf32> to vector<4x128xf32>
    %53 = vector.extract_strided_slice %33 {offsets = [4, 4], sizes = [4, 128], strides = [1, 1]} : vector<8x136xf32> to vector<4x128xf32>
    %54 = tpu.concatenate %52, %53 in 0 : vector<4x128xf32>, vector<4x128xf32> -> vector<8x128xf32>
    %55 = arith.truncf %54 : vector<8x128xf32> to vector<8x128xbf16>
    %56 = vector.extract_strided_slice %34 {offsets = [2, 0, 0], sizes = [1, 16, 8], strides = [1, 1, 1]} : vector<5x16x8xbf16> to vector<1x16x8xbf16>
    %57 = vector.shape_cast %56 : vector<1x16x8xbf16> to vector<16x8xbf16>
    %cst_20 = arith.constant dense<0.000000e+00> : vector<16x128xf32>
    %58 = tpu.matmul %57, %55, %cst_20 {dimension_numbers = #tpu.dot_dimension_numbers<[1], [0], [0], [1], [0, 0, 1, 1], [], []>} : vector<16x8xbf16>, vector<8x128xbf16>, vector<16x128xf32> -> vector<16x128xf32>
    %59 = arith.addf %51, %58 : vector<16x128xf32>
    %60 = vector.extract_strided_slice %33 {offsets = [0, 5], sizes = [4, 128], strides = [1, 1]} : vector<8x136xf32> to vector<4x128xf32>
    %61 = vector.extract_strided_slice %33 {offsets = [4, 6], sizes = [4, 128], strides = [1, 1]} : vector<8x136xf32> to vector<4x128xf32>
    %62 = tpu.concatenate %60, %61 in 0 : vector<4x128xf32>, vector<4x128xf32> -> vector<8x128xf32>
    %63 = arith.truncf %62 : vector<8x128xf32> to vector<8x128xbf16>
    %64 = vector.extract_strided_slice %34 {offsets = [3, 0, 0], sizes = [1, 16, 8], strides = [1, 1, 1]} : vector<5x16x8xbf16> to vector<1x16x8xbf16>
    %65 = vector.shape_cast %64 : vector<1x16x8xbf16> to vector<16x8xbf16>
    %cst_21 = arith.constant dense<0.000000e+00> : vector<16x128xf32>
    %66 = tpu.matmul %65, %63, %cst_21 {dimension_numbers = #tpu.dot_dimension_numbers<[1], [0], [0], [1], [0, 0, 1, 1], [], []>} : vector<16x8xbf16>, vector<8x128xbf16>, vector<16x128xf32> -> vector<16x128xf32>
    %67 = arith.addf %59, %66 : vector<16x128xf32>
    %68 = vector.extract_strided_slice %33 {offsets = [0, 6], sizes = [4, 128], strides = [1, 1]} : vector<8x136xf32> to vector<4x128xf32>
    %69 = vector.extract_strided_slice %33 {offsets = [4, 8], sizes = [4, 128], strides = [1, 1]} : vector<8x136xf32> to vector<4x128xf32>
    %70 = tpu.concatenate %68, %69 in 0 : vector<4x128xf32>, vector<4x128xf32> -> vector<8x128xf32>
    %71 = arith.truncf %70 : vector<8x128xf32> to vector<8x128xbf16>
    %72 = vector.extract_strided_slice %34 {offsets = [4, 0, 0], sizes = [1, 16, 8], strides = [1, 1, 1]} : vector<5x16x8xbf16> to vector<1x16x8xbf16>
    %73 = vector.shape_cast %72 : vector<1x16x8xbf16> to vector<16x8xbf16>
    %cst_22 = arith.constant dense<0.000000e+00> : vector<16x128xf32>
    %74 = tpu.matmul %73, %71, %cst_22 {dimension_numbers = #tpu.dot_dimension_numbers<[1], [0], [0], [1], [0, 0, 1, 1], [], []>} : vector<16x8xbf16>, vector<8x128xbf16>, vector<16x128xf32> -> vector<16x128xf32>
    %75 = arith.addf %67, %74 : vector<16x128xf32>
    %76 = vector.extract_strided_slice %1 {offsets = [0, 4], sizes = [8, 128], strides = [1, 1]} : vector<8x136xbf16> to vector<8x128xbf16>
    %c0_23 = arith.constant 0 : index
    %c0_24 = arith.constant 0 : index
    %77 = vector.load %arg8[%c0_23, %c0_24] : memref<16x8xbf16, #tpu.memory_space<vmem>>, vector<16x8xbf16>
    %cst_25 = arith.constant dense<0.000000e+00> : vector<16x128xf32>
    %78 = tpu.matmul %77, %76, %cst_25 {dimension_numbers = #tpu.dot_dimension_numbers<[1], [0], [0], [1], [0, 0, 1, 1], [], []>} : vector<16x8xbf16>, vector<8x128xbf16>, vector<16x128xf32> -> vector<16x128xf32>
    %79 = arith.addf %75, %78 : vector<16x128xf32>
    %c0_26 = arith.constant 0 : index
    %c0_27 = arith.constant 0 : index
    %c0_28 = arith.constant 0 : index
    %80 = vector.load %arg9[%c0_26, %c0_27, %c0_28] : memref<1x16x128xf32, #tpu.memory_space<vmem>>, vector<1x16x128xf32>
    %81 = vector.shape_cast %80 : vector<1x16x128xf32> to vector<16x128xf32>
    %82 = vector.shape_cast %79 : vector<16x128xf32> to vector<1x16x128xf32>
    tpu.vector_store %arg9[%c0_26, %c0_27, %c0_28], %82 {strides = array<i32>} : memref<1x16x128xf32, #tpu.memory_space<vmem>>, vector<1x16x128xf32>,
    return
  }
  func.func @transform_0(%arg0: i32, %arg1: i32) -> (i32, i32, i32, i32) {
    %c0_i32 = arith.constant 0 : i32
    %c0_i32_0 = arith.constant 0 : i32
    %c0_i32_1 = arith.constant 0 : i32
    return %arg0, %arg1, %c0_i32, %c0_i32_0 : i32, i32, i32, i32
  }
  func.func @transform_1(%arg0: i32, %arg1: i32) -> (i32, i32) {
    %c0_i32 = arith.constant 0 : i32
    %c0_i32_0 = arith.constant 0 : i32
    %c0_i32_1 = arith.constant 0 : i32
    return %c0_i32, %c0_i32_0 : i32, i32
  }
  func.func @transform_2(%arg0: i32, %arg1: i32) -> (i32, i32) {
    %c0_i32 = arith.constant 0 : i32
    %c0_i32_0 = arith.constant 0 : i32
    %c0_i32_1 = arith.constant 0 : i32
    return %c0_i32, %c0_i32_0 : i32, i32
  }
  func.func @transform_3(%arg0: i32, %arg1: i32) -> (i32, i32) {
    %c0_i32 = arith.constant 0 : i32
    %c0_i32_0 = arith.constant 0 : i32
    %c0_i32_1 = arith.constant 0 : i32
    return %c0_i32, %c0_i32_0 : i32, i32
  }
  func.func @transform_4(%arg0: i32, %arg1: i32) -> (i32, i32) {
    %c0_i32 = arith.constant 0 : i32
    %c0_i32_0 = arith.constant 0 : i32
    %c0_i32_1 = arith.constant 0 : i32
    return %c0_i32, %c0_i32_0 : i32, i32
  }
  func.func @transform_5(%arg0: i32, %arg1: i32) -> (i32, i32, i32) {
    %c0_i32 = arith.constant 0 : i32
    %c0_i32_0 = arith.constant 0 : i32
    %c0_i32_1 = arith.constant 0 : i32
    %c0_i32_2 = arith.constant 0 : i32
    return %c0_i32, %c0_i32_0, %c0_i32_1 : i32, i32, i32
  }
  func.func @transform_6(%arg0: i32, %arg1: i32) -> (i32, i32) {
    %c0_i32 = arith.constant 0 : i32
    %c0_i32_0 = arith.constant 0 : i32
    %c0_i32_1 = arith.constant 0 : i32
    return %c0_i32, %c0_i32_0 : i32, i32
  }
  func.func @transform_7(%arg0: i32, %arg1: i32) -> (i32, i32, i32) {
    %c0_i32 = arith.constant 0 : i32
    %c0_i32_0 = arith.constant 0 : i32
    return %arg0, %c0_i32, %arg1 : i32, i32, i32
  }
}

</mosaic_0001>

<llo_original>
// kernel: basic_block_forward.1
$region0: #{basic_block_forward.1}
  #allocation0 [shape = 'u32[]', space=smem, size = 0x4, offset = 0x4, fixed_abs, tag = 'smem constant byte address 0x4 - core index']
  #allocation1 [shape = 'u32[144,128]{1,0:T(1,128)}', space=vmem, size = 0x12000, scoped, tag = 'internal scratch']
  %s0 = inlined_call_operand.vmem [shape: bf16[2,2,8,136], index: 0, kind: input, shape index: {}]
  %s1 = inlined_call_operand.vmem [shape: f32[16,1], index: 1, kind: input, shape index: {}]
  %s2 = inlined_call_operand.vmem [shape: f32[16,1], index: 2, kind: input, shape index: {}]
  %s3 = inlined_call_operand.vmem [shape: bf16[8,16], index: 3, kind: input, shape index: {}]
  %s4 = inlined_call_operand.vmem [shape: f32[8,1], index: 4, kind: input, shape index: {}]
  %s5 = inlined_call_operand.vmem [shape: bf16[5,16,8], index: 5, kind: input, shape index: {}]
  %s6 = inlined_call_operand.vmem [shape: bf16[16,8], index: 6, kind: input, shape index: {}]
  %s7 = inlined_call_operand.hbm [shape: f32[2,16,256], index: 7, kind: output, shape index: {}]
  %s8 = sld [smem:[#allocation0]]
  $region61: #{basic_block_forward.1} parent=0
    _
  %s10 = ssub.s32 1, %s8
  %s11 = scalar_select 0, %s10, %s8
  $region1: #{basic_block_forward.1} parent=0
    #allocation2 [shape = 'u8[16384]{0}', space=vmem, size = 0x4000, scoped, tag = 'output window, operand 0']
    #allocation3 [shape = 's32[2]{0}', space=sflag, size = 0x8, scoped, tag = 'scoped memory for basic_block_forward.1']
    %12 = vsyncpa [#allocation3], 0
    %s13 = scalar_lea.sflag [#allocation3], 1
    %14 = vsyncpa %s13, 0
    loop: start=0, step=1, limit=6
    $region2: #{basic_block_forward.1} parent=1 // loop_pre_header
      _
    $region3: #{basic_block_forward.1} parent=1 // loop_header
      %s16 = sphi 0, %s20
      %p17 = scmp.ge.s32.totalorder %s16, 6
      %s23 = sphi 0, %s35
      %s24 = sphi 0, %s31
      %s25 = sphi 0, %s23
      %s26 = sphi 0, %s24
      %s27 = sphi 0, %s25
      %s28 = sphi 0, %s26
      %s40 = sphi 0, %s42
      %s43 = sphi 0, %s40
      %s44 = sphi 0, %s43
      %s60 = sphi 0, %s44
      %s64 = sphi 0, %s64
      %s66 = sphi 0, %s64
      %s67 = sphi 0, %s66
      %s81 = sphi 0, %s67
      %s85 = sphi 0, %s85
      %s87 = sphi 0, %s85
      %s88 = sphi 0, %s87
      %s102 = sphi 0, %s88
      %s106 = sphi 0, %s106
      %s108 = sphi 0, %s106
      %s109 = sphi 0, %s108
      %s123 = sphi 0, %s109
      %s127 = sphi 0, %s127
      %s129 = sphi 0, %s127
      %s130 = sphi 0, %s129
      %s144 = sphi 0, %s130
      %s148 = sphi 0, %s148
      %s150 = sphi 0, %s148
      %s151 = sphi 0, %s150
      %s165 = sphi 0, %s151
      %s169 = sphi 0, %s169
      %s171 = sphi 0, %s169
      %s172 = sphi 0, %s171
      %s186 = sphi 0, %s172
      %s194 = sphi 0, %s196
      %s197 = sphi 0, %s194
      %s198 = sphi 0, %s197
      %s214 = sphi 0, %s198
    $region4: #{basic_block_forward.1} parent=1 // loop_header_branch
      %19 = sbr.rel (%p17) target = $region8
    $region5: #{basic_block_forward.1} parent=1 // loop_body
      %s21 = ssub.s32 %s16, 1
      %s22 = ssub.s32 %s16, 2
      %s29 = sadd.s32 1, %s24
      %p30 = scmp.ge.s32.totalorder %s29, 2
      %s31 = scalar_select %p30, 0, %s29
      %s32 = sadd.s32 1, %s23
      %s33 = scalar_select %p30, %s32, %s23
      %p34 = scmp.ge.s32.totalorder %s33, 2
      %s35 = scalar_select %p34, 0, %s33
      %s36 = ssub.s32 %s23, %s35
      %s37 = ssub.s32 %s24, %s31
      %s38 = sor.u32 %s36, %s37
      %p39 = scmp.eq.s32.totalorder %s38, 0
      %s41 = sadd.s32 %s40, 1
      %s42 = scalar_select %p39, %s40, %s41
      %p45 = pneg %p39
      %p46 = scmp.eq.s32.totalorder %s16, 3
      %p47 = por %p45, %p46
      %p48 = scmp.ne.s32.totalorder %s40, %s43
      %p49 = scmp.eq.s32.totalorder %s16, 0
      %p50 = por %p48, %p49
      %p51 = scmp.ne.s32.totalorder %s40, %s43
      %p52 = scmp.eq.s32.totalorder %s21, 3
      %p53 = por %p51, %p52
      %p54 = scmp.ne.s32.totalorder %s43, %s44
      %p55 = scmp.eq.s32.totalorder %s21, 0
      %p56 = por %p54, %p55
      %p57 = scmp.ne.s32.totalorder %s43, %s44
      %p58 = scmp.eq.s32.totalorder %s22, 3
      %p59 = por %p57, %p58
      %p61 = scmp.ne.s32.totalorder %s44, %s60
      %p62 = scmp.eq.s32.totalorder %s22, 0
      %p63 = por %p61, %p62
      %s65 = sadd.s32 %s64, 1
      %p68 = scmp.eq.s32.totalorder %s16, 3
      %p69 = scmp.ne.s32.totalorder %s64, %s66
      %p70 = scmp.eq.s32.totalorder %s16, 0
      %p71 = por %p69, %p70
      %p72 = scmp.ne.s32.totalorder %s64, %s66
      %p73 = scmp.eq.s32.totalorder %s21, 3
      %p74 = por %p72, %p73
      %p75 = scmp.ne.s32.totalorder %s66, %s67
      %p76 = scmp.eq.s32.totalorder %s21, 0
      %p77 = por %p75, %p76
      %p78 = scmp.ne.s32.totalorder %s66, %s67
      %p79 = scmp.eq.s32.totalorder %s22, 3
      %p80 = por %p78, %p79
      %p82 = scmp.ne.s32.totalorder %s67, %s81
      %p83 = scmp.eq.s32.totalorder %s22, 0
      %p84 = por %p82, %p83
      %s86 = sadd.s32 %s85, 1
      %p89 = scmp.eq.s32.totalorder %s16, 3
      %p90 = scmp.ne.s32.totalorder %s85, %s87
      %p91 = scmp.eq.s32.totalorder %s16, 0
      %p92 = por %p90, %p91
      %p93 = scmp.ne.s32.totalorder %s85, %s87
      %p94 = scmp.eq.s32.totalorder %s21, 3
      %p95 = por %p93, %p94
      %p96 = scmp.ne.s32.totalorder %s87, %s88
      %p97 = scmp.eq.s32.totalorder %s21, 0
      %p98 = por %p96, %p97
      %p99 = scmp.ne.s32.totalorder %s87, %s88
      %p100 = scmp.eq.s32.totalorder %s22, 3
      %p101 = por %p99, %p100
      %p103 = scmp.ne.s32.totalorder %s88, %s102
      %p104 = scmp.eq.s32.totalorder %s22, 0
      %p105 = por %p103, %p104
      %s107 = sadd.s32 %s106, 1
      %p110 = scmp.eq.s32.totalorder %s16, 3
      %p111 = scmp.ne.s32.totalorder %s106, %s108
      %p112 = scmp.eq.s32.totalorder %s16, 0
      %p113 = por %p111, %p112
      %p114 = scmp.ne.s32.totalorder %s106, %s108
      %p115 = scmp.eq.s32.totalorder %s21, 3
      %p116 = por %p114, %p115
      %p117 = scmp.ne.s32.totalorder %s108, %s109
      %p118 = scmp.eq.s32.totalorder %s21, 0
      %p119 = por %p117, %p118
      %p120 = scmp.ne.s32.totalorder %s108, %s109
      %p121 = scmp.eq.s32.totalorder %s22, 3
      %p122 = por %p120, %p121
      %p124 = scmp.ne.s32.totalorder %s109, %s123
      %p125 = scmp.eq.s32.totalorder %s22, 0
      %p126 = por %p124, %p125
      %s128 = sadd.s32 %s127, 1
      %p131 = scmp.eq.s32.totalorder %s16, 3
      %p132 = scmp.ne.s32.totalorder %s127, %s129
      %p133 = scmp.eq.s32.totalorder %s16, 0
      %p134 = por %p132, %p133
      %p135 = scmp.ne.s32.totalorder %s127, %s129
      %p136 = scmp.eq.s32.totalorder %s21, 3
      %p137 = por %p135, %p136
      %p138 = scmp.ne.s32.totalorder %s129, %s130
      %p139 = scmp.eq.s32.totalorder %s21, 0
      %p140 = por %p138, %p139
      %p141 = scmp.ne.s32.totalorder %s129, %s130
      %p142 = scmp.eq.s32.totalorder %s22, 3
      %p143 = por %p141, %p142
      %p145 = scmp.ne.s32.totalorder %s130, %s144
      %p146 = scmp.eq.s32.totalorder %s22, 0
      %p147 = por %p145, %p146
      %s149 = sadd.s32 %s148, 1
      %p152 = scmp.eq.s32.totalorder %s16, 3
      %p153 = scmp.ne.s32.totalorder %s148, %s150
      %p154 = scmp.eq.s32.totalorder %s16, 0
      %p155 = por %p153, %p154
      %p156 = scmp.ne.s32.totalorder %s148, %s150
      %p157 = scmp.eq.s32.totalorder %s21, 3
      %p158 = por %p156, %p157
      %p159 = scmp.ne.s32.totalorder %s150, %s151
      %p160 = scmp.eq.s32.totalorder %s21, 0
      %p161 = por %p159, %p160
      %p162 = scmp.ne.s32.totalorder %s150, %s151
      %p163 = scmp.eq.s32.totalorder %s22, 3
      %p164 = por %p162, %p163
      %p166 = scmp.ne.s32.totalorder %s151, %s165
      %p167 = scmp.eq.s32.totalorder %s22, 0
      %p168 = por %p166, %p167
      %s170 = sadd.s32 %s169, 1
      %p173 = scmp.eq.s32.totalorder %s16, 3
      %p174 = scmp.ne.s32.totalorder %s169, %s171
      %p175 = scmp.eq.s32.totalorder %s16, 0
      %p176 = por %p174, %p175
      %p177 = scmp.ne.s32.totalorder %s169, %s171
      %p178 = scmp.eq.s32.totalorder %s21, 3
      %p179 = por %p177, %p178
      %p180 = scmp.ne.s32.totalorder %s171, %s172
      %p181 = scmp.eq.s32.totalorder %s21, 0
      %p182 = por %p180, %p181
      %p183 = scmp.ne.s32.totalorder %s171, %s172
      %p184 = scmp.eq.s32.totalorder %s22, 3
      %p185 = por %p183, %p184
      %p187 = scmp.ne.s32.totalorder %s172, %s186
      %p188 = scmp.eq.s32.totalorder %s22, 0
      %p189 = por %p187, %p188
      %s190 = ssub.s32 %s23, %s35
      %s191 = ssub.s32 %s24, %s31
      %s192 = sor.u32 %s190, %s191
      %p193 = scmp.eq.s32.totalorder %s192, 0
      %s195 = sadd.s32 %s194, 1
      %s196 = scalar_select %p193, %s194, %s195
      %p199 = pneg %p193
      %p200 = scmp.eq.s32.totalorder %s16, 3
      %p201 = por %p199, %p200
      %p202 = scmp.ne.s32.totalorder %s194, %s197
      %p203 = scmp.eq.s32.totalorder %s16, 0
      %p204 = por %p202, %p203
      %p205 = scmp.ne.s32.totalorder %s194, %s197
      %p206 = scmp.eq.s32.totalorder %s21, 3
      %p207 = por %p205, %p206
      %p208 = scmp.ne.s32.totalorder %s197, %s198
      %p209 = scmp.eq.s32.totalorder %s21, 0
      %p210 = por %p208, %p209
      %p211 = scmp.ne.s32.totalorder %s197, %s198
      %p212 = scmp.eq.s32.totalorder %s22, 3
      %p213 = por %p211, %p212
      %p215 = scmp.ne.s32.totalorder %s198, %s214
      %p216 = scmp.eq.s32.totalorder %s22, 0
      %p217 = por %p215, %p216
      %p218 = scmp.le.s32.totalorder 1, %s16
      %p219 = scmp.lt.s32.totalorder %s16, 5
      %p220 = pnand %p218, %p219
      %p221 = pneg %p220
      // Predicated region
      $region9: #{basic_block_forward.1} parent=5 // pred_check
        _
      $region10: #{basic_block_forward.1} parent=5 // pred_check_branch
        %223 = sbr.rel (%p220) target = $region12
      $region11: #{basic_block_forward.1} parent=5 // pred_region
        %s224 = ssub.s32 %s16, 1
        // Predicated region
        $region13: #{basic_block_forward.1} parent=11 // pred_check
          %p225 = pneg %p77
        $region14: #{basic_block_forward.1} parent=11 // pred_check_branch
          %227 = sbr.rel (%p225) target = $region16
        $region15: #{basic_block_forward.1} parent=11 // pred_region
          _
        $region16: #{basic_block_forward.1} parent=11 // pred_fallthru
          _
        // Predicated region
        $region17: #{basic_block_forward.1} parent=11 // pred_check
          %p228 = pneg %p98
        $region18: #{basic_block_forward.1} parent=11 // pred_check_branch
          %230 = sbr.rel (%p228) target = $region20
        $region19: #{basic_block_forward.1} parent=11 // pred_region
          _
        $region20: #{basic_block_forward.1} parent=11 // pred_fallthru
          _
        // Predicated region
        $region21: #{basic_block_forward.1} parent=11 // pred_check
          %p231 = pneg %p119
        $region22: #{basic_block_forward.1} parent=11 // pred_check_branch
          %233 = sbr.rel (%p231) target = $region24
        $region23: #{basic_block_forward.1} parent=11 // pred_region
          _
        $region24: #{basic_block_forward.1} parent=11 // pred_fallthru
          _
        // Predicated region
        $region25: #{basic_block_forward.1} parent=11 // pred_check
          %p234 = pneg %p140
        $region26: #{basic_block_forward.1} parent=11 // pred_check_branch
          %236 = sbr.rel (%p234) target = $region28
        $region27: #{basic_block_forward.1} parent=11 // pred_region
          _
        $region28: #{basic_block_forward.1} parent=11 // pred_fallthru
          _
        // Predicated region
        $region29: #{basic_block_forward.1} parent=11 // pred_check
          %p237 = pneg %p161
        $region30: #{basic_block_forward.1} parent=11 // pred_check_branch
          %239 = sbr.rel (%p237) target = $region32
        $region31: #{basic_block_forward.1} parent=11 // pred_region
          _
        $region32: #{basic_block_forward.1} parent=11 // pred_fallthru
          _
        // Predicated region
        $region33: #{basic_block_forward.1} parent=11 // pred_check
          %p240 = pneg %p182
        $region34: #{basic_block_forward.1} parent=11 // pred_check_branch
          %242 = sbr.rel (%p240) target = $region36
        $region35: #{basic_block_forward.1} parent=11 // pred_region
          _
        $region36: #{basic_block_forward.1} parent=11 // pred_fallthru
          _
      $region12: #{basic_block_forward.1} parent=5 // pred_fallthru
        _
      %p243 = scmp.lt.s32.totalorder %s16, 4
      // Predicated region
      $region37: #{basic_block_forward.1} parent=5 // pred_check
        %p244 = pneg %p243
      $region38: #{basic_block_forward.1} parent=5 // pred_check_branch
        %246 = sbr.rel (%p244) target = $region40
      $region39: #{basic_block_forward.1} parent=5 // pred_region
        // Predicated region
        $region41: #{basic_block_forward.1} parent=39 // pred_check
          %p247 = pneg %p50
        $region42: #{basic_block_forward.1} parent=39 // pred_check_branch
          %249 = sbr.rel (%p247) target = $region44
        $region43: #{basic_block_forward.1} parent=39 // pred_region
          %p250 = scmp.lt.s32.totalorder %s23, 1
          %s251 = scalar_select %p250, %s23, 1
          %p252 = scmp.lt.s32.totalorder %s24, 1
          %s253 = scalar_select %p252, %s24, 1
          %s254 = smul.addr %s253, 2
          %s255 = smul.addr %s251, 4
          %s256 = sadd.s32 %s254, %s255
          %s257 = smul.addr %s256, 4
          %s258 = scalar_lea.vmem %s0, %s257
        $region44: #{basic_block_forward.1} parent=39 // pred_fallthru
          _
      $region40: #{basic_block_forward.1} parent=5 // pred_fallthru
        _
      %p259 = scmp.le.s32.totalorder 1, %s16
      %p260 = scmp.lt.s32.totalorder %s16, 5
      %p261 = pnand %p259, %p260
      %p262 = pneg %p261
      // Predicated region
      $region45: #{basic_block_forward.1} parent=5 // pred_check
        _
      $region46: #{basic_block_forward.1} parent=5 // pred_check_branch
        %264 = sbr.rel (%p261) target = $region48
      $region47: #{basic_block_forward.1} parent=5 // pred_region
        %s265 = ssub.s32 %s16, 1
        %p266 = scmp.lt.s32.totalorder %s25, 1
        %s267 = scalar_select %p266, %s25, 1
        %p268 = scmp.lt.s32.totalorder %s26, 1
        %s269 = scalar_select %p268, %s26, 1
        %s270 = smul.addr %s269, 2
        %s271 = smul.addr %s267, 4
        %s272 = sadd.s32 %s270, %s271
        %s273 = smul.addr %s272, 4
        %s274 = scalar_lea.vmem %s0, %s273
        %p275 = pneg %p56
        %p276 = pneg %p53
        %p277 = pneg %p77
        %p278 = pneg %p74
        %p279 = pneg %p98
        %p280 = pneg %p95
        %p281 = pneg %p119
        %p282 = pneg %p116
        %p283 = pneg %p140
        %p284 = pneg %p137
        %p285 = pneg %p161
        %p286 = pneg %p158
        %p287 = pneg %p182
        %p288 = pneg %p179
        %p289 = pneg %p210
        %p290 = pneg %p207
        %s291 = sand.u32 %s197, 1
        %s292 = scalar_lea.sflag [#allocation3], %s291
        %s293 = sand.u32 %s197, 1
        %s294 = smul.addr %s293, 16
        %s295 = scalar_lea.vmem [#allocation2], %s294
        %p296 = scmp.lt.s32.totalorder %s25, 1
        %s297 = scalar_select %p296, %s25, 1
        %p298 = scmp.lt.s32.totalorder %s26, 1
        %s299 = scalar_select %p298, %s26, 1
        %s300 = smul.addr %s299, 2
        %s301 = smul.addr %s297, 4
        %s302 = sadd.s32 %s300, %s301
        %s303 = smul.addr %s302, 4
        %s304 = scalar_lea.vmem %s0, %s303
        %v306 = vld [vmem:[%s304] sm:$0xff]
        %v307 = vunpack.c.l.bf16 %v306
        %v308 = vunpack.c.h.bf16 %v306
        %v309 = vld [vmem:[%s1] sm:$0xff]
        %v310 = vld [vmem:[%s1 + $0x8] sm:$0xff]
        %312 = vset.pattern.permute.xlu0 0
        %313 = vperm.xlu0 %312, %v309
        %v314 = vpop.permute.xlu0 %313
        %317 = vset.pattern.permute.xlu0 0
        %318 = vperm.xlu0 %317, %v310
        %v319 = vpop.permute.xlu0 %318
        %v321 = vmul.f32 %v307, %v314
        %v322 = vmul.f32 %v308, %v314
        %v323 = vmul.f32 %v307, %v319
        %v324 = vmul.f32 %v308, %v319
        %v325 = vld [vmem:[%s2] sm:$0xff]
        %v326 = vld [vmem:[%s2 + $0x8] sm:$0xff]
        %328 = vset.pattern.permute.xlu0 0
        %329 = vperm.xlu0 %328, %v325
        %v330 = vpop.permute.xlu0 %329
        %333 = vset.pattern.permute.xlu0 0
        %334 = vperm.xlu0 %333, %v326
        %v335 = vpop.permute.xlu0 %334
        %v337 = vadd.f32 %v321, %v330
        %v338 = vadd.f32 %v322, %v330
        %v339 = vadd.f32 %v323, %v335
        %v340 = vadd.f32 %v324, %v335
        %v341 = vmax.f32 %v337, 0.0
        %v342 = vmax.f32 %v338, 0.0
        %v343 = vmax.f32 %v339, 0.0
        %v344 = vmax.f32 %v340, 0.0
        %v345 = vld [vmem:[%s3] sm:$0xf]
        %v346 = vpack.c.bf16 %v343, %v341
        %v347 = vpack.c.bf16 %v344, %v342
        %v348 = vld [vmem:[%s4] sm:$0xff]
        %350 = vset.pattern.permute.xlu0 0
        %351 = vperm.xlu0 %350, %v348
        %v352 = vpop.permute.xlu0 %351
        %vm354 = vcmask 130048
        %v356 = vsel %vm354, %v345, 0
        %358 = vmatprep.subr.bf16.mxu0 %v347
        %359 = vmatpush1.bf16.msra.mxu0 %v346
        %360 = vmatprep.subr.bf16.mxu0 0
        %361 = vmatpush1.bf16.msra.mxu0 0
        %362 = vmatprep.subr.bf16.mxu0 0
        %363 = vmatpush1.bf16.msra.mxu0 0
        %364 = vmatprep.subr.bf16.mxu0 0
        %365 = vmatpush1.bf16.msra.mxu0 0
        %366 = vmatprep.subr.bf16.mxu0 0
        %367 = vmatpush1.bf16.msra.mxu0 0
        %368 = vmatprep.subr.bf16.mxu0 0
        %369 = vmatpush1.bf16.msra.mxu0 0
        %370 = vmatprep.subr.bf16.mxu0 0
        %371 = vmatpush1.bf16.msra.mxu0 0
        %372 = vmatprep.subr.bf16.mxu0 0
        %373 = vmatpush1.bf16.msra.mxu0 0
        %374 = vmatprep.subr.bf16.mxu0 0
        %375 = vmatpush1.bf16.msra.mxu0 0
        %376 = vmatprep.subr.bf16.mxu0 0
        %377 = vmatpush1.bf16.msra.mxu0 0
        %378 = vmatprep.subr.bf16.mxu0 0
        %379 = vmatpush1.bf16.msra.mxu0 0
        %380 = vmatprep.subr.bf16.mxu0 0
        %381 = vmatpush1.bf16.msra.mxu0 0
        %382 = vmatprep.subr.bf16.mxu0 0
        %383 = vmatpush1.bf16.msra.mxu0 0
        %384 = vmatprep.subr.bf16.mxu0 0
        %385 = vmatpush1.bf16.msra.mxu0 0
        %386 = vmatprep.subr.bf16.mxu0 0
        %387 = vmatpush1.bf16.msra.mxu0 0
        %388 = vmatprep.subr.bf16.mxu0 0
        %389 = vmatpush1.bf16.msra.mxu0 0
        %390 = vmatprep.mubr.bf16.mxu0 0
        %391 = vmatmul.mubr.bf16.gmra.mrb[0].mxu0 %v356
        %v392 = vpop.f32.mrb[0].mxu0
        %v393 = vadd.f32 %v352, %v392
        %v394 = vpop.f32.mrb[0].mxu0
        %v395 = vadd.f32 %v352, %v394
        %v396 = vpop.f32.mrb[0].mxu0
        %v397 = vpop.f32.mrb[0].mxu0
        %398 = vdwg.mxu0
        %v399 = vmax.f32 %v393, 0.0
        %v400 = vmax.f32 %v395, 0.0
        %v401 = vlaneseq
        %v402 = vand.u32 %v401, 127
        %v403 = vadd.s32 %v402, 128
        %s404 = smul.u32 %s26, 128
        %s405 = ssub.s32 %s404, 4
        %v406 = vstv %s405
        %v407 = vadd.s32 %v402, %v406
        %v408 = vadd.s32 %v403, %v406
        %vm409 = vcmp.ge.s32.totalorder %v407, 0
        %vm410 = vcmp.ge.s32.totalorder %v408, 0
        %vm411 = vcmp.lt.s32.totalorder %v407, 256
        %vm412 = vcmp.lt.s32.totalorder %v408, 256
        %vm413 = vmand %vm409, %vm411
        %vm414 = vmand %vm410, %vm412
        %v415 = vsel %vm413, 1, 0
        %v416 = vsel %vm414, 1, 0
        %vm417 = vcmp.eq.s32.totalorder %v415, 1
        %vm418 = vcmp.eq.s32.totalorder %v416, 1
        %v419 = vsel %vm417, %v399, 0.0
        %v420 = vsel %vm418, %v400, 0.0
        %v421 = vld [vmem:[%s5] sm:$0xf]
        %v422 = vld [vmem:[%s5 + $0x4] sm:$0xf]
        %v423 = vld [vmem:[%s5 + $0x8] sm:$0xf]
        %v424 = vld [vmem:[%s5 + $0xc] sm:$0xf]
        %v425 = vld [vmem:[%s5 + $0x10] sm:$0xf]
        %v426 = vld [vmem:[%s5 + $0x14] sm:$0xf]
        %v427 = vld [vmem:[%s5 + $0x18] sm:$0xf]
        %v428 = vld [vmem:[%s5 + $0x1c] sm:$0xf]
        %v429 = vld [vmem:[%s5 + $0x20] sm:$0xf]
        %v430 = vld [vmem:[%s5 + $0x24] sm:$0xf]
        %432 = vrot.lane.b32.xlu0 %v419, 2
        %v433 = vpop.permute.xlu0 %432
        %vm435 = vcmask 1043456
        %v436 = vsel %vm435, %v419, %v433
        %v437 = vsel %vm435, %v420, %v433
        %v438 = vpack.c.bf16 %v436, %v436
        %v439 = vpack.c.bf16 %v437, %v437
        %441 = vrot.lane.b32.xlu0 %v419, 1
        %v442 = vpop.permute.xlu0 %441
        %443 = vrot.lane.b32.xlu0 %v420, 1
        %v444 = vpop.permute.xlu0 %443
        %vm445 = vcmask 7168
        %v446 = vsel %vm445, %v442, %v444
        %v449 = vsel %vm435, %v419, %v442
        %v450 = vsel %vm435, %v420, %v446
        %v451 = vpack.c.bf16 %v449, %v449
        %v452 = vpack.c.bf16 %v450, %v450
        %v455 = vunpack.c.l.b16 %v423
        %v456 = vunpack.c.l.b16 %v424
        %v457 = vpack.c.b16 %v456, %v455
        %460 = vrot.lane.b32.xlu0 %v451, 125
        %v461 = vpop.permute.xlu0 %460
        %462 = vrot.lane.b32.xlu0 %v452, 125
        %v463 = vpop.permute.xlu0 %462
        %vm464 = vcmask 1022976
        %v465 = vsel %vm464, %v461, %v463
        %vm466 = vcmask 64512
        %v468 = vsel %vm466, %v457, 0
        %v471 = vsel %vm435, %v465, 0
        %473 = vmatprep.subr.bf16.mxu0 0
        %474 = vmatpush1.bf16.msra.mxu0 %v471
        %475 = vmatprep.subr.bf16.mxu0 0
        %476 = vmatpush1.bf16.msra.mxu0 0
        %477 = vmatprep.subr.bf16.mxu0 0
        %478 = vmatpush1.bf16.msra.mxu0 0
        %479 = vmatprep.subr.bf16.mxu0 0
        %480 = vmatpush1.bf16.msra.mxu0 0
        %481 = vmatprep.subr.bf16.mxu0 0
        %482 = vmatpush1.bf16.msra.mxu0 0
        %483 = vmatprep.subr.bf16.mxu0 0
        %484 = vmatpush1.bf16.msra.mxu0 0
        %485 = vmatprep.subr.bf16.mxu0 0
        %486 = vmatpush1.bf16.msra.mxu0 0
        %487 = vmatprep.subr.bf16.mxu0 0
        %488 = vmatpush1.bf16.msra.mxu0 0
        %489 = vmatprep.subr.bf16.mxu0 0
        %490 = vmatpush1.bf16.msra.mxu0 0
        %491 = vmatprep.subr.bf16.mxu0 0
        %492 = vmatpush1.bf16.msra.mxu0 0
        %493 = vmatprep.subr.bf16.mxu0 0
        %494 = vmatpush1.bf16.msra.mxu0 0
        %495 = vmatprep.subr.bf16.mxu0 0
        %496 = vmatpush1.bf16.msra.mxu0 0
        %497 = vmatprep.subr.bf16.mxu0 0
        %498 = vmatpush1.bf16.msra.mxu0 0
        %499 = vmatprep.subr.bf16.mxu0 0
        %500 = vmatpush1.bf16.msra.mxu0 0
        %501 = vmatprep.subr.bf16.mxu0 0
        %502 = vmatpush1.bf16.msra.mxu0 0
        %503 = vmatprep.subr.bf16.mxu0 0
        %504 = vmatpush1.bf16.msra.mxu0 0
        %505 = vmatprep.mubr.bf16.mxu0 0
        %506 = vmatmul.mubr.bf16.gmra.mrb[0].mxu0 %v468
        %v507 = vpop.f32.mrb[0].mxu0
        %v508 = vadd.f32 0.0, %v507
        %v509 = vpop.f32.mrb[0].mxu0
        %v510 = vpop.f32.mrb[0].mxu0
        %v511 = vadd.f32 0.0, %v510
        %v512 = vpop.f32.mrb[0].mxu0
        %513 = vdwg.mxu0
        %v516 = vunpack.c.l.b16 %v421
        %v517 = vunpack.c.l.b16 %v422
        %v518 = vpack.c.b16 %v517, %v516
        %521 = vrot.lane.b32.xlu0 %v438, 126
        %v522 = vpop.permute.xlu0 %521
        %523 = vrot.lane.b32.xlu0 %v439, 126
        %v524 = vpop.permute.xlu0 %523
        %vm525 = vcmask 1031168
        %v526 = vsel %vm525, %v522, %v524
        %v528 = vsel %vm466, %v518, 0
        %v531 = vsel %vm435, %v526, 0
        %533 = vmatprep.subr.bf16.mxu0 0
        %534 = vmatpush1.bf16.msra.mxu0 %v531
        %535 = vmatprep.subr.bf16.mxu0 0
        %536 = vmatpush1.bf16.msra.mxu0 0
        %537 = vmatprep.subr.bf16.mxu0 0
        %538 = vmatpush1.bf16.msra.mxu0 0
        %539 = vmatprep.subr.bf16.mxu0 0
        %540 = vmatpush1.bf16.msra.mxu0 0
        %541 = vmatprep.subr.bf16.mxu0 0
        %542 = vmatpush1.bf16.msra.mxu0 0
        %543 = vmatprep.subr.bf16.mxu0 0
        %544 = vmatpush1.bf16.msra.mxu0 0
        %545 = vmatprep.subr.bf16.mxu0 0
        %546 = vmatpush1.bf16.msra.mxu0 0
        %547 = vmatprep.subr.bf16.mxu0 0
        %548 = vmatpush1.bf16.msra.mxu0 0
        %549 = vmatprep.subr.bf16.mxu0 0
        %550 = vmatpush1.bf16.msra.mxu0 0
        %551 = vmatprep.subr.bf16.mxu0 0
        %552 = vmatpush1.bf16.msra.mxu0 0
        %553 = vmatprep.subr.bf16.mxu0 0
        %554 = vmatpush1.bf16.msra.mxu0 0
        %555 = vmatprep.subr.bf16.mxu0 0
        %556 = vmatpush1.bf16.msra.mxu0 0
        %557 = vmatprep.subr.bf16.mxu0 0
        %558 = vmatpush1.bf16.msra.mxu0 0
        %559 = vmatprep.subr.bf16.mxu0 0
        %560 = vmatpush1.bf16.msra.mxu0 0
        %561 = vmatprep.subr.bf16.mxu0 0
        %562 = vmatpush1.bf16.msra.mxu0 0
        %563 = vmatprep.subr.bf16.mxu0 0
        %564 = vmatpush1.bf16.msra.mxu0 0
        %565 = vmatprep.mubr.bf16.mxu0 0
        %566 = vmatmul.mubr.bf16.gmra.mrb[0].mxu0 %v528
        %v567 = vpop.f32.mrb[0].mxu0
        %v568 = vadd.f32 %v508, %v567
        %v569 = vpop.f32.mrb[0].mxu0
        %v570 = vpop.f32.mrb[0].mxu0
        %v571 = vadd.f32 %v511, %v570
        %v572 = vpop.f32.mrb[0].mxu0
        %573 = vdwg.mxu0
        %v574 = vpack.c.bf16 %v419, %v419
        %v575 = vpack.c.bf16 %v420, %v420
        %v578 = vunpack.c.l.b16 %v425
        %v579 = vunpack.c.l.b16 %v426
        %v580 = vpack.c.b16 %v579, %v578
        %583 = vrot.lane.b32.xlu0 %v574, 124
        %v584 = vpop.permute.xlu0 %583
        %585 = vrot.lane.b32.xlu0 %v575, 124
        %v586 = vpop.permute.xlu0 %585
        %vm587 = vcmask 1014784
        %v588 = vsel %vm587, %v584, %v586
        %v590 = vsel %vm466, %v580, 0
        %v593 = vsel %vm435, %v588, 0
        %595 = vmatprep.subr.bf16.mxu0 0
        %596 = vmatpush1.bf16.msra.mxu0 %v593
        %597 = vmatprep.subr.bf16.mxu0 0
        %598 = vmatpush1.bf16.msra.mxu0 0
        %599 = vmatprep.subr.bf16.mxu0 0
        %600 = vmatpush1.bf16.msra.mxu0 0
        %601 = vmatprep.subr.bf16.mxu0 0
        %602 = vmatpush1.bf16.msra.mxu0 0
        %603 = vmatprep.subr.bf16.mxu0 0
        %604 = vmatpush1.bf16.msra.mxu0 0
        %605 = vmatprep.subr.bf16.mxu0 0
        %606 = vmatpush1.bf16.msra.mxu0 0
        %607 = vmatprep.subr.bf16.mxu0 0
        %608 = vmatpush1.bf16.msra.mxu0 0
        %609 = vmatprep.subr.bf16.mxu0 0
        %610 = vmatpush1.bf16.msra.mxu0 0
        %611 = vmatprep.subr.bf16.mxu0 0
        %612 = vmatpush1.bf16.msra.mxu0 0
        %613 = vmatprep.subr.bf16.mxu0 0
        %614 = vmatpush1.bf16.msra.mxu0 0
        %615 = vmatprep.subr.bf16.mxu0 0
        %616 = vmatpush1.bf16.msra.mxu0 0
        %617 = vmatprep.subr.bf16.mxu0 0
        %618 = vmatpush1.bf16.msra.mxu0 0
        %619 = vmatprep.subr.bf16.mxu0 0
        %620 = vmatpush1.bf16.msra.mxu0 0
        %621 = vmatprep.subr.bf16.mxu0 0
        %622 = vmatpush1.bf16.msra.mxu0 0
        %623 = vmatprep.subr.bf16.mxu0 0
        %624 = vmatpush1.bf16.msra.mxu0 0
        %625 = vmatprep.subr.bf16.mxu0 0
        %626 = vmatpush1.bf16.msra.mxu0 0
        %627 = vmatprep.mubr.bf16.mxu0 0
        %628 = vmatmul.mubr.bf16.gmra.mrb[0].mxu0 %v590
        %v629 = vpop.f32.mrb[0].mxu0
        %v630 = vadd.f32 0.0, %v629
        %v631 = vpop.f32.mrb[0].mxu0
        %v632 = vpop.f32.mrb[0].mxu0
        %v633 = vadd.f32 0.0, %v632
        %v634 = vpop.f32.mrb[0].mxu0
        %635 = vdwg.mxu0
        %v636 = vadd.f32 %v568, %v630
        %v637 = vadd.f32 %v571, %v633
        %638 = vrot.lane.b32.xlu0 %v419, 127
        %v639 = vpop.permute.xlu0 %638
        %640 = vrot.lane.b32.xlu0 %v420, 127
        %v641 = vpop.permute.xlu0 %640
        %vm642 = vcmask 1039360
        %v643 = vsel %vm642, %v639, %v641
        %v646 = vsel %vm435, %v419, %v643
        %v647 = vsel %vm435, %v420, %v641
        %v648 = vpack.c.bf16 %v646, %v646
        %v649 = vpack.c.bf16 %v647, %v647
        %v652 = vunpack.c.l.b16 %v427
        %v653 = vunpack.c.l.b16 %v428
        %v654 = vpack.c.b16 %v653, %v652
        %657 = vrot.lane.b32.xlu0 %v648, 123
        %v658 = vpop.permute.xlu0 %657
        %659 = vrot.lane.b32.xlu0 %v649, 123
        %v660 = vpop.permute.xlu0 %659
        %vm661 = vcmask 1006592
        %v662 = vsel %vm661, %v658, %v660
        %v664 = vsel %vm466, %v654, 0
        %v667 = vsel %vm435, %v662, 0
        %669 = vmatprep.subr.bf16.mxu0 0
        %670 = vmatpush1.bf16.msra.mxu0 %v667
        %671 = vmatprep.subr.bf16.mxu0 0
        %672 = vmatpush1.bf16.msra.mxu0 0
        %673 = vmatprep.subr.bf16.mxu0 0
        %674 = vmatpush1.bf16.msra.mxu0 0
        %675 = vmatprep.subr.bf16.mxu0 0
        %676 = vmatpush1.bf16.msra.mxu0 0
        %677 = vmatprep.subr.bf16.mxu0 0
        %678 = vmatpush1.bf16.msra.mxu0 0
        %679 = vmatprep.subr.bf16.mxu0 0
        %680 = vmatpush1.bf16.msra.mxu0 0
        %681 = vmatprep.subr.bf16.mxu0 0
        %682 = vmatpush1.bf16.msra.mxu0 0
        %683 = vmatprep.subr.bf16.mxu0 0
        %684 = vmatpush1.bf16.msra.mxu0 0
        %685 = vmatprep.subr.bf16.mxu0 0
        %686 = vmatpush1.bf16.msra.mxu0 0
        %687 = vmatprep.subr.bf16.mxu0 0
        %688 = vmatpush1.bf16.msra.mxu0 0
        %689 = vmatprep.subr.bf16.mxu0 0
        %690 = vmatpush1.bf16.msra.mxu0 0
        %691 = vmatprep.subr.bf16.mxu0 0
        %692 = vmatpush1.bf16.msra.mxu0 0
        %693 = vmatprep.subr.bf16.mxu0 0
        %694 = vmatpush1.bf16.msra.mxu0 0
        %695 = vmatprep.subr.bf16.mxu0 0
        %696 = vmatpush1.bf16.msra.mxu0 0
        %697 = vmatprep.subr.bf16.mxu0 0
        %698 = vmatpush1.bf16.msra.mxu0 0
        %699 = vmatprep.subr.bf16.mxu0 0
        %700 = vmatpush1.bf16.msra.mxu0 0
        %701 = vmatprep.mubr.bf16.mxu0 0
        %702 = vmatmul.mubr.bf16.gmra.mrb[0].mxu0 %v664
        %v703 = vpop.f32.mrb[0].mxu0
        %v704 = vadd.f32 0.0, %v703
        %v705 = vpop.f32.mrb[0].mxu0
        %v706 = vpop.f32.mrb[0].mxu0
        %v707 = vadd.f32 0.0, %v706
        %v708 = vpop.f32.mrb[0].mxu0
        %709 = vdwg.mxu0
        %v710 = vadd.f32 %v636, %v704
        %v711 = vadd.f32 %v637, %v707
        %712 = vrot.lane.b32.xlu0 %v419, 126
        %v713 = vpop.permute.xlu0 %712
        %714 = vrot.lane.b32.xlu0 %v420, 126
        %v715 = vpop.permute.xlu0 %714
        %vm716 = vcmask 1031168
        %v717 = vsel %vm716, %v713, %v715
        %v720 = vsel %vm435, %v419, %v717
        %v721 = vsel %vm435, %v420, %v715
        %v722 = vpack.c.bf16 %v720, %v720
        %v723 = vpack.c.bf16 %v721, %v721
        %v726 = vunpack.c.l.b16 %v429
        %v727 = vunpack.c.l.b16 %v430
        %v728 = vpack.c.b16 %v727, %v726
        %731 = vrot.lane.b32.xlu0 %v722, 122
        %v732 = vpop.permute.xlu0 %731
        %733 = vrot.lane.b32.xlu0 %v723, 122
        %v734 = vpop.permute.xlu0 %733
        %vm735 = vcmask 998400
        %v736 = vsel %vm735, %v732, %v734
        %v738 = vsel %vm466, %v728, 0
        %v741 = vsel %vm435, %v736, 0
        %743 = vmatprep.subr.bf16.mxu0 0
        %744 = vmatpush1.bf16.msra.mxu0 %v741
        %745 = vmatprep.subr.bf16.mxu0 0
        %746 = vmatpush1.bf16.msra.mxu0 0
        %747 = vmatprep.subr.bf16.mxu0 0
        %748 = vmatpush1.bf16.msra.mxu0 0
        %749 = vmatprep.subr.bf16.mxu0 0
        %750 = vmatpush1.bf16.msra.mxu0 0
        %751 = vmatprep.subr.bf16.mxu0 0
        %752 = vmatpush1.bf16.msra.mxu0 0
        %753 = vmatprep.subr.bf16.mxu0 0
        %754 = vmatpush1.bf16.msra.mxu0 0
        %755 = vmatprep.subr.bf16.mxu0 0
        %756 = vmatpush1.bf16.msra.mxu0 0
        %757 = vmatprep.subr.bf16.mxu0 0
        %758 = vmatpush1.bf16.msra.mxu0 0
        %759 = vmatprep.subr.bf16.mxu0 0
        %760 = vmatpush1.bf16.msra.mxu0 0
        %761 = vmatprep.subr.bf16.mxu0 0
        %762 = vmatpush1.bf16.msra.mxu0 0
        %763 = vmatprep.subr.bf16.mxu0 0
        %764 = vmatpush1.bf16.msra.mxu0 0
        %765 = vmatprep.subr.bf16.mxu0 0
        %766 = vmatpush1.bf16.msra.mxu0 0
        %767 = vmatprep.subr.bf16.mxu0 0
        %768 = vmatpush1.bf16.msra.mxu0 0
        %769 = vmatprep.subr.bf16.mxu0 0
        %770 = vmatpush1.bf16.msra.mxu0 0
        %771 = vmatprep.subr.bf16.mxu0 0
        %772 = vmatpush1.bf16.msra.mxu0 0
        %773 = vmatprep.subr.bf16.mxu0 0
        %774 = vmatpush1.bf16.msra.mxu0 0
        %775 = vmatprep.mubr.bf16.mxu0 0
        %776 = vmatmul.mubr.bf16.gmra.mrb[0].mxu0 %v738
        %v777 = vpop.f32.mrb[0].mxu0
        %v778 = vadd.f32 0.0, %v777
        %v779 = vpop.f32.mrb[0].mxu0
        %v780 = vpop.f32.mrb[0].mxu0
        %v781 = vadd.f32 0.0, %v780
        %v782 = vpop.f32.mrb[0].mxu0
        %783 = vdwg.mxu0
        %v784 = vadd.f32 %v710, %v778
        %v785 = vadd.f32 %v711, %v781
        %v786 = vld [vmem:[%s6] sm:$0xf]
        %v787 = vld [vmem:[%s6 + $0x4] sm:$0xf]
        %v790 = vunpack.c.l.b16 %v786
        %v791 = vunpack.c.l.b16 %v787
        %v792 = vpack.c.b16 %v791, %v790
        %v794 = vunpack.c.l.b16 %v306
        %v795 = vunpack.c.h.b16 %v306
        %v796 = vpack.c.b16 %v794, %v794
        %v797 = vpack.c.b16 %v795, %v795
        %798 = vrot.lane.b32.xlu0 %v796, 124
        %v799 = vpop.permute.xlu0 %798
        %800 = vrot.lane.b32.xlu0 %v797, 124
        %v801 = vpop.permute.xlu0 %800
        %v802 = vsel %vm587, %v799, %v801
        %v804 = vsel %vm466, %v792, 0
        %v807 = vsel %vm435, %v802, 0
        %809 = vmatprep.subr.bf16.mxu0 0
        %810 = vmatpush1.bf16.msra.mxu0 %v807
        %811 = vmatprep.subr.bf16.mxu0 0
        %812 = vmatpush1.bf16.msra.mxu0 0
        %813 = vmatprep.subr.bf16.mxu0 0
        %814 = vmatpush1.bf16.msra.mxu0 0
        %815 = vmatprep.subr.bf16.mxu0 0
        %816 = vmatpush1.bf16.msra.mxu0 0
        %817 = vmatprep.subr.bf16.mxu0 0
        %818 = vmatpush1.bf16.msra.mxu0 0
        %819 = vmatprep.subr.bf16.mxu0 0
        %820 = vmatpush1.bf16.msra.mxu0 0
        %821 = vmatprep.subr.bf16.mxu0 0
        %822 = vmatpush1.bf16.msra.mxu0 0
        %823 = vmatprep.subr.bf16.mxu0 0
        %824 = vmatpush1.bf16.msra.mxu0 0
        %825 = vmatprep.subr.bf16.mxu0 0
        %826 = vmatpush1.bf16.msra.mxu0 0
        %827 = vmatprep.subr.bf16.mxu0 0
        %828 = vmatpush1.bf16.msra.mxu0 0
        %829 = vmatprep.subr.bf16.mxu0 0
        %830 = vmatpush1.bf16.msra.mxu0 0
        %831 = vmatprep.subr.bf16.mxu0 0
        %832 = vmatpush1.bf16.msra.mxu0 0
        %833 = vmatprep.subr.bf16.mxu0 0
        %834 = vmatpush1.bf16.msra.mxu0 0
        %835 = vmatprep.subr.bf16.mxu0 0
        %836 = vmatpush1.bf16.msra.mxu0 0
        %837 = vmatprep.subr.bf16.mxu0 0
        %838 = vmatpush1.bf16.msra.mxu0 0
        %839 = vmatprep.subr.bf16.mxu0 0
        %840 = vmatpush1.bf16.msra.mxu0 0
        %841 = vmatprep.mubr.bf16.mxu0 0
        %842 = vmatmul.mubr.bf16.gmra.mrb[0].mxu0 %v804
        %v843 = vpop.f32.mrb[0].mxu0
        %v844 = vadd.f32 0.0, %v843
        %v845 = vpop.f32.mrb[0].mxu0
        %v846 = vpop.f32.mrb[0].mxu0
        %v847 = vadd.f32 0.0, %v846
        %v848 = vpop.f32.mrb[0].mxu0
        %849 = vdwg.mxu0
        %v850 = vadd.f32 %v784, %v844
        %v851 = vadd.f32 %v785, %v847
        %852 = vst [vmem:[%s295] sm:$0xff] %v850
        %853 = vst [vmem:[%s295 + $0x8] sm:$0xff] %v851
        %s854 = sand.u32 %s197, 1
        %s855 = scalar_lea.sflag [#allocation3], %s854
        %s856 = sand.u32 %s197, 1
        %s857 = smul.addr %s856, 16
        %s858 = scalar_lea.vmem [#allocation2], %s857
        // Predicated region
        $region49: #{basic_block_forward.1} parent=47 // pred_check
          %p859 = pneg %p207
        $region50: #{basic_block_forward.1} parent=47 // pred_check_branch
          %861 = sbr.rel (%p859) target = $region52
        $region51: #{basic_block_forward.1} parent=47 // pred_region
          %s863 = ssub.s32 256, 256
          %864 = vsyncadd %s855, %s863
          %s865 = smul.addr %s25, 4
          %s866 = sadd.s32 %s26, %s865
          %s867 = smul.addr %s866, 128
          %s868 = scalar_lea.hbm %s7, %s867
          %s869 = sshll.u32 %s858, 4
          %s870 = int_to_ptr.vmem [resolvable:$true] %s869
          %875 = dma.vmem_to_hbm [thread:$0]  %s870, 256, %s868, %s855, 128, 256, 8
        $region52: #{basic_block_forward.1} parent=47 // pred_fallthru
          _
      $region48: #{basic_block_forward.1} parent=5 // pred_fallthru
        _
      %p876 = scmp.le.s32.totalorder 2, %s16
      // Predicated region
      $region53: #{basic_block_forward.1} parent=5 // pred_check
        %p877 = pneg %p876
      $region54: #{basic_block_forward.1} parent=5 // pred_check_branch
        %879 = sbr.rel (%p877) target = $region56
      $region55: #{basic_block_forward.1} parent=5 // pred_region
        %s880 = ssub.s32 %s16, 2
        // Predicated region
        $region57: #{basic_block_forward.1} parent=55 // pred_check
          %p881 = pneg %p213
        $region58: #{basic_block_forward.1} parent=55 // pred_check_branch
          %883 = sbr.rel (%p881) target = $region60
        $region59: #{basic_block_forward.1} parent=55 // pred_region
          %s884 = sand.u32 %s198, 1
          %s885 = scalar_lea.sflag [#allocation3], %s884
          %s886 = sand.u32 %s198, 1
          %s887 = smul.addr %s886, 16
          %s888 = scalar_lea.vmem [#allocation2], %s887
          %889 = dma.done %s885, 256
        $region60: #{basic_block_forward.1} parent=55 // pred_fallthru
          _
      $region56: #{basic_block_forward.1} parent=5 // pred_fallthru
        _
    $region6: #{basic_block_forward.1} parent=1 // loop_footer
      %s20 = sadd.s32 1, %s16
    $region7: #{basic_block_forward.1} parent=1 // loop_footer_branch
      %15 = sbr.rel target = $region3
    $region8: #{basic_block_forward.1} parent=1 // loop_exit
      _
    %890 = vsyncpa [#allocation3], 1
    %s891 = scalar_lea.sflag [#allocation3], 1
    %892 = vsyncpa %s891, 1

</llo_original>
